<compile_context>
chip_gen: v5e
topology: v5e:2x2
jax: 0.10.0
libtpu: 0.0.40
codegen_flags: <defaults>
</compile_context>

<pallas_src>
import functools

import jax
import jax.numpy as jnp
from jax.experimental import pallas as pl
from jax.experimental.pallas import tpu as pltpu

_LANE = 128


def _message_kernel(p1_ref, p2_ref, adj_ref, w3_ref, o_ref):
    """out[i,j,:] = P1[i] + P2[j] + adj[i,j] @ W3 for one (i, j) tile.

    P1/P2 (per-node projections, bias folded into P1) are precomputed outside
    the grid; the only MXU work per step is the per-pair adj term.
    """
    ti = adj_ref.shape[1]
    tj = adj_ref.shape[2]
    H = adj_ref.shape[3]
    out_dim = w3_ref.shape[1]

    adj = adj_ref[0].reshape(ti * tj, H)                 # leading-dim collapse
    acc = jnp.dot(adj, w3_ref[...],
                  preferred_element_type=jnp.float32)    # (ti*tj, 6H) f32

    out = (acc.reshape(ti, tj, out_dim)
           + p1_ref[0][:, None, :]
           + p2_ref[0][None, :, :])
    o_ref[0] = out.astype(o_ref.dtype)


def _ceil_to(x, m):
    return ((x + m - 1) // m) * m


def _round_tile(t, S, m):
    """Legal tile extent: multiple of m (sublane packing) or the full dim S."""
    if t >= S:
        return S
    return max((t // m) * m, min(S, m))


def _vmem_budget():
    """(tile budget bytes, Mosaic vmem_limit_bytes) with v7x-safe fallback."""
    try:
        phys = int(pltpu.get_tpu_info().vmem_capacity_bytes)
    except Exception:  # noqa: BLE001 - conservative fallback (v7x: 64 MiB)
        phys = 64 * 1024 * 1024
    limit = min(int(phys * 0.70), 96 * 1024 * 1024)
    return limit // 2, limit


def _pick_tiles(S, H, out_dim, budget_bytes):
    """Largest legal (ti, tj) whose padded, double-buffered footprint fits."""
    h_pad = _ceil_to(H, _LANE)          # adj minor dim padded to 128 lanes
    o_pad = _ceil_to(out_dim, _LANE)    # 6H=192 pads to 256 lanes in VMEM
    bytes_per_pair = (2 * 2 * h_pad     # adj  bf16, double-buffered
                      + 2 * 2 * o_pad   # out  bf16, double-buffered
                      + 2 * 4 * o_pad)  # f32 temporaries (acc + pre-cast out)
    bytes_per_pair = int(bytes_per_pair * 1.25)   # slack: vregs/compiler scratch
    max_pairs = max(budget_bytes // bytes_per_pair, 256)

    min_t = min(S, 16)
    # Prefer full j rows (tj == S): contiguous adj/out HBM slabs, P2 fully hoisted.
    tj = _round_tile(min(S, max_pairs // min_t), S, 16)
    tj = max(tj, min_t)
    ti = _round_tile(max(max_pairs // tj, 1), S, 16)
    ti = max(ti, min_t)
    return ti, tj


@functools.partial(jax.jit,
                   static_argnames=("ti", "tj", "vmem_limit_bytes", "out_dtype"))
def _message_linear_impl(h_node, h_adj_matrix, w, b, *, ti, tj,
                         vmem_limit_bytes, out_dtype):
    B, S, H = h_node.shape
    out_dim = w.shape[0]

    # Split the Linear weight along its input dim (concat order h_i|h_j|adj).
    wt = w.T.astype(jnp.float32)                          # [3H, 6H]
    w1, w2, w3 = wt[0:H], wt[H:2 * H], wt[2 * H:3 * H]

    hn_bf = h_node.astype(jnp.bfloat16)
    # Per-node projections hoisted out of the grid (computed once in XLA),
    # bias folded into P1 so the kernel has no bias input at all.
    p1 = (jnp.dot(hn_bf, w1.astype(jnp.bfloat16),
                  preferred_element_type=jnp.float32)
          + b.astype(jnp.float32))                        # [B, S, 6H] f32
    p2 = jnp.dot(hn_bf, w2.astype(jnp.bfloat16),
                 preferred_element_type=jnp.float32)      # [B, S, 6H] f32

    adj_bf = h_adj_matrix.astype(jnp.bfloat16)            # halve adj DMA bytes
    w3_bf = w3.astype(jnp.bfloat16)

    grid = (B, pl.cdiv(S, ti), pl.cdiv(S, tj))            # batch first (even TC split)

    p1_spec = pl.BlockSpec((1, ti, out_dim), lambda bb, it, jt: (bb, it, 0))
    p2_spec = pl.BlockSpec((1, tj, out_dim), lambda bb, it, jt: (bb, jt, 0))
    adj_spec = pl.BlockSpec((1, ti, tj, H), lambda bb, it, jt: (bb, it, jt, 0))
    w3_spec = pl.BlockSpec((H, out_dim), lambda bb, it, jt: (0, 0))
    out_spec = pl.BlockSpec((1, ti, tj, out_dim),
                            lambda bb, it, jt: (bb, it, jt, 0))

    return pl.pallas_call(
        _message_kernel,
        out_shape=jax.ShapeDtypeStruct((B, S, S, out_dim), out_dtype),
        grid_spec=pltpu.PrefetchScalarGridSpec(
            num_scalar_prefetch=0,
            grid=grid,
            in_specs=[p1_spec, p2_spec, adj_spec, w3_spec],
            out_specs=out_spec,
        ),
        compiler_params=pltpu.CompilerParams(
            dimension_semantics=("parallel", "parallel", "parallel"),
            vmem_limit_bytes=vmem_limit_bytes,
        ),
    )(p1, p2, adj_bf, w3_bf)


def message_linear(h_node, h_adj_matrix, w, b, *, out_dtype=jnp.bfloat16):
    """Fused `concat(h_i, h_j, adj) @ W.T + b` over all ordered node pairs.

    h_node: [B, S, H], h_adj_matrix: [B, S, S, H]
    w: [6H, 3H] (PyTorch nn.Linear layout), b: [6H]
    returns: [B, S, S, 6H] in `out_dtype` (bf16 by default; f32 accumulation
    inside, bf16 MXU operands — documented precision trade-off).
    """
    B, S, H = h_node.shape
    out_dim, in_dim = w.shape
    assert in_dim == 3 * H and h_adj_matrix.shape == (B, S, S, H)

    budget, limit = _vmem_budget()
    ti, tj = _pick_tiles(S, H, out_dim, budget)
    return _message_linear_impl(h_node, h_adj_matrix, w, b, ti=ti, tj=tj,
                                vmem_limit_bytes=limit, out_dtype=out_dtype)


def propagation_block_forward(h_node, h_adj_matrix, fwd_weights, fwd_biases):
    """JAX/Pallas equivalent of PropagationBlock.forward (repaired semantics).

    Only the last round's Linear output is observable in the reference code,
    so only that projection is computed (earlier rounds would be dead work).
    """
    B, S, H = h_node.shape
    m = message_linear(h_node, h_adj_matrix, fwd_weights[-1], fwd_biases[-1])
    return m.reshape(B, S * S, m.shape[-1])   # free reshape (contiguous)


def _init_linear(key, out_dim, in_dim):
    """Deterministic init matching nn.Linear's default U(-1/sqrt(fan_in), ...)."""
    kw, kb = jax.random.split(key)
    bound = 1.0 / (in_dim ** 0.5)
    w = jax.random.uniform(kw, (out_dim, in_dim), jnp.float32, -bound, bound)
    b = jax.random.uniform(kb, (out_dim,), jnp.float32, -bound, bound)
    return w, b


if __name__ == "__main__":
    hidden_dim = 32
    num_round = 3
    B, S, H = 2, 8, hidden_dim
    in_dim, out_dim = 3 * H, 2 * 3 * H

    key = jax.random.PRNGKey(0)
    k_node, k_adj, k_params = jax.random.split(key, 3)

    h_node = jax.random.normal(k_node, (B, S, H), jnp.float32)
    h_adj_matrix = jax.random.normal(k_adj, (B, S, S, H), jnp.float32)

    fwd_weights, fwd_biases = [], []
    for T in range(num_round):
        w, b = _init_linear(jax.random.fold_in(k_params, T), out_dim, in_dim)
        fwd_weights.append(w)
        fwd_biases.append(b)

    out = propagation_block_forward(h_node, h_adj_matrix, fwd_weights,
                                    fwd_biases)
    out = jax.block_until_ready(out)

    # Pure-JAX f32 reference for the last round (materialized concat + Linear).
    hi = jnp.broadcast_to(h_node[:, :, None, :], (B, S, S, H))
    hj = jnp.broadcast_to(h_node[:, None, :, :], (B, S, S, H))
    m_cat = jnp.concatenate([hi, hj, h_adj_matrix], axis=-1).reshape(-1, in_dim)
    ref = (m_cat @ fwd_weights[-1].T + fwd_biases[-1]).reshape(B, S * S, out_dim)

    assert out.shape == (B, S * S, out_dim)
    # bf16 operands / bf16 output -> loosened tolerance vs the f32 reference.
    assert jnp.allclose(out.astype(jnp.float32), ref, atol=5e-2, rtol=5e-2), (
        float(jnp.max(jnp.abs(out.astype(jnp.float32) - ref))))
    print("KERNEL_OK")
</pallas_src>

<mosaic_0001>
module attributes {stable_mosaic.version = 11 : i64} {
  func.func @_message_kernel(%arg0: i32, %arg1: i32, %arg2: i32, %arg3: memref<1x8x192xf32, #tpu.memory_space<vmem>>, %arg4: memref<1x8x192xf32, #tpu.memory_space<vmem>>, %arg5: memref<1x8x8x32xbf16, #tpu.memory_space<vmem>>, %arg6: memref<32x192xbf16, #tpu.memory_space<vmem>>, %arg7: memref<1x8x8x192xbf16, #tpu.memory_space<vmem>>) attributes {dimension_semantics = [#tpu.dimension_semantics<parallel>, #tpu.dimension_semantics<parallel>, #tpu.dimension_semantics<parallel>], iteration_bounds = array<i64: 2, 1, 1>, scalar_prefetch = 0 : i64, scratch_operands = 0 : i64, tpu.core_type = #tpu.core_type<tc>, window_params = [{transform_indices = @transform_0, window_bounds = array<i64: 1, 8, 192>}, {transform_indices = @transform_1, window_bounds = array<i64: 1, 8, 192>}, {transform_indices = @transform_2, window_bounds = array<i64: 1, 8, 8, 32>}, {pipeline_mode = #tpu.pipeline_mode<synchronous>, transform_indices = @transform_3, window_bounds = array<i64: 32, 192>}, {transform_indices = @transform_4, window_bounds = array<i64: 1, 8, 8, 192>}]} {
    %c0 = arith.constant 0 : index
    %c0_0 = arith.constant 0 : index
    %c0_1 = arith.constant 0 : index
    %c0_2 = arith.constant 0 : index
    %0 = vector.load %arg5[%c0, %c0_0, %c0_1, %c0_2] : memref<1x8x8x32xbf16, #tpu.memory_space<vmem>>, vector<1x8x8x32xbf16>
    %1 = vector.shape_cast %0 : vector<1x8x8x32xbf16> to vector<8x8x32xbf16>
    %2 = vector.shape_cast %1 : vector<8x8x32xbf16> to vector<64x32xbf16>
    %c0_3 = arith.constant 0 : index
    %c0_4 = arith.constant 0 : index
    %3 = vector.load %arg6[%c0_3, %c0_4] : memref<32x192xbf16, #tpu.memory_space<vmem>>, vector<32x192xbf16>
    %cst = arith.constant dense<0.000000e+00> : vector<64x192xf32>
    %4 = tpu.matmul %2, %3, %cst {dimension_numbers = #tpu.dot_dimension_numbers<[1], [0], [0], [1], [0, 0, 1, 1], [], []>} : vector<64x32xbf16>, vector<32x192xbf16>, vector<64x192xf32> -> vector<64x192xf32>
    %5 = vector.shape_cast %4 : vector<64x192xf32> to vector<8x8x192xf32>
    %c0_5 = arith.constant 0 : index
    %c0_6 = arith.constant 0 : index
    %c0_7 = arith.constant 0 : index
    %6 = vector.load %arg3[%c0_5, %c0_6, %c0_7] : memref<1x8x192xf32, #tpu.memory_space<vmem>>, vector<1x8x192xf32>
    %7 = vector.shape_cast %6 : vector<1x8x192xf32> to vector<8x192xf32>
    %8 = vector.shape_cast %7 : vector<8x192xf32> to vector<8x1x192xf32>
    %9 = vector.broadcast %8 : vector<8x1x192xf32> to vector<8x8x192xf32>
    %10 = arith.addf %5, %9 : vector<8x8x192xf32>
    %c0_8 = arith.constant 0 : index
    %c0_9 = arith.constant 0 : index
    %c0_10 = arith.constant 0 : index
    %11 = vector.load %arg4[%c0_8, %c0_9, %c0_10] : memref<1x8x192xf32, #tpu.memory_space<vmem>>, vector<1x8x192xf32>
    %12 = vector.shape_cast %11 : vector<1x8x192xf32> to vector<8x192xf32>
    %13 = vector.shape_cast %12 : vector<8x192xf32> to vector<1x8x192xf32>
    %14 = vector.broadcast %13 : vector<1x8x192xf32> to vector<8x8x192xf32>
    %15 = arith.addf %10, %14 : vector<8x8x192xf32>
    %16 = arith.truncf %15 : vector<8x8x192xf32> to vector<8x8x192xbf16>
    %c0_11 = arith.constant 0 : index
    %c0_12 = arith.constant 0 : index
    %c0_13 = arith.constant 0 : index
    %c0_14 = arith.constant 0 : index
    %17 = vector.load %arg7[%c0_11, %c0_12, %c0_13, %c0_14] : memref<1x8x8x192xbf16, #tpu.memory_space<vmem>>, vector<1x8x8x192xbf16>
    %18 = vector.shape_cast %17 : vector<1x8x8x192xbf16> to vector<8x8x192xbf16>
    %19 = vector.shape_cast %16 : vector<8x8x192xbf16> to vector<1x8x8x192xbf16>
    tpu.vector_store %arg7[%c0_11, %c0_12, %c0_13, %c0_14], %19 {strides = array<i32>} : memref<1x8x8x192xbf16, #tpu.memory_space<vmem>>, vector<1x8x8x192xbf16>,
    return
  }
  func.func @transform_0(%arg0: i32, %arg1: i32, %arg2: i32) -> (i32, i32, i32) {
    %c0_i32 = arith.constant 0 : i32
    %c0_i32_0 = arith.constant 0 : i32
    return %arg0, %arg1, %c0_i32 : i32, i32, i32
  }
  func.func @transform_1(%arg0: i32, %arg1: i32, %arg2: i32) -> (i32, i32, i32) {
    %c0_i32 = arith.constant 0 : i32
    %c0_i32_0 = arith.constant 0 : i32
    return %arg0, %arg2, %c0_i32 : i32, i32, i32
  }
  func.func @transform_2(%arg0: i32, %arg1: i32, %arg2: i32) -> (i32, i32, i32, i32) {
    %c0_i32 = arith.constant 0 : i32
    %c0_i32_0 = arith.constant 0 : i32
    return %arg0, %arg1, %arg2, %c0_i32 : i32, i32, i32, i32
  }
  func.func @transform_3(%arg0: i32, %arg1: i32, %arg2: i32) -> (i32, i32) {
    %c0_i32 = arith.constant 0 : i32
    %c0_i32_0 = arith.constant 0 : i32
    %c0_i32_1 = arith.constant 0 : i32
    return %c0_i32, %c0_i32_0 : i32, i32
  }
  func.func @transform_4(%arg0: i32, %arg1: i32, %arg2: i32) -> (i32, i32, i32, i32) {
    %c0_i32 = arith.constant 0 : i32
    %c0_i32_0 = arith.constant 0 : i32
    return %arg0, %arg1, %arg2, %c0_i32 : i32, i32, i32, i32
  }
}

</mosaic_0001>

<llo_original>
// kernel: _message_linear_impl.1
$region0: #{_message_linear_impl.1}
  #allocation0 [shape = 'u32[]', space=smem, size = 0x4, offset = 0x4, fixed_abs, tag = 'smem constant byte address 0x4 - core index']
  #allocation1 [shape = 'u32[72,128]{1,0:T(1,128)}', space=vmem, size = 0x9000, scoped, tag = 'internal scratch']
  %s0 = inlined_call_operand.vmem [shape: f32[2,8,192], index: 0, kind: input, shape index: {}]
  %s1 = inlined_call_operand.vmem [shape: f32[2,8,192], index: 1, kind: input, shape index: {}]
  %s2 = inlined_call_operand.vmem [shape: bf16[2,8,8,32], index: 2, kind: input, shape index: {}]
  %s3 = inlined_call_operand.vmem [shape: bf16[32,192], index: 3, kind: input, shape index: {}]
  %s4 = inlined_call_operand.hbm [shape: bf16[2,8,8,192], index: 4, kind: output, shape index: {}]
  %s5 = sld [smem:[#allocation0]]
  $region49: #{_message_linear_impl.1} parent=0
    _
  %s7 = ssub.s32 1, %s5
  %s8 = scalar_select 0, %s7, %s5
  $region1: #{_message_linear_impl.1} parent=0
    #allocation2 [shape = 'u8[65536]{0}', space=vmem, size = 0x10000, scoped, tag = 'output window, operand 0']
    #allocation3 [shape = 's32[2]{0}', space=sflag, size = 0x8, scoped, tag = 'scoped memory for _message_linear_impl.1']
    %9 = vsyncpa [#allocation3], 0
    %s10 = scalar_lea.sflag [#allocation3], 1
    %11 = vsyncpa %s10, 0
    loop: start=0, step=1, limit=4
    $region2: #{_message_linear_impl.1} parent=1 // loop_pre_header
      _
    $region3: #{_message_linear_impl.1} parent=1 // loop_header
      %s13 = sphi 0, %s17
      %p14 = scmp.ge.s32.totalorder %s13, 4
      %s20 = sphi 0, %s39
      %s21 = sphi 0, %s35
      %s22 = sphi 0, %s31
      %s23 = sphi 0, %s20
      %s24 = sphi 0, %s21
      %s25 = sphi 0, %s22
      %s26 = sphi 0, %s23
      %s27 = sphi 0, %s24
      %s28 = sphi 0, %s25
      %s44 = sphi 0, %s46
      %s47 = sphi 0, %s44
      %s48 = sphi 0, %s47
      %s64 = sphi 0, %s48
      %s72 = sphi 0, %s74
      %s75 = sphi 0, %s72
      %s76 = sphi 0, %s75
      %s92 = sphi 0, %s76
      %s102 = sphi 0, %s104
      %s105 = sphi 0, %s102
      %s106 = sphi 0, %s105
      %s122 = sphi 0, %s106
      %s126 = sphi 0, %s126
      %s128 = sphi 0, %s126
      %s129 = sphi 0, %s128
      %s143 = sphi 0, %s129
      %s153 = sphi 0, %s155
      %s156 = sphi 0, %s153
      %s157 = sphi 0, %s156
      %s173 = sphi 0, %s157
    $region4: #{_message_linear_impl.1} parent=1 // loop_header_branch
      %16 = sbr.rel (%p14) target = $region8
    $region5: #{_message_linear_impl.1} parent=1 // loop_body
      %s18 = ssub.s32 %s13, 1
      %s19 = ssub.s32 %s13, 2
      %s29 = sadd.s32 1, %s22
      %p30 = scmp.ge.s32.totalorder %s29, 1
      %s31 = scalar_select %p30, 0, %s29
      %s32 = sadd.s32 1, %s21
      %s33 = scalar_select %p30, %s32, %s21
      %p34 = scmp.ge.s32.totalorder %s33, 1
      %s35 = scalar_select %p34, 0, %s33
      %s36 = sadd.s32 1, %s20
      %s37 = scalar_select %p34, %s36, %s20
      %p38 = scmp.ge.s32.totalorder %s37, 2
      %s39 = scalar_select %p38, 0, %s37
      %s40 = ssub.s32 %s20, %s39
      %s41 = ssub.s32 %s21, %s35
      %s42 = sor.u32 %s40, %s41
      %p43 = scmp.eq.s32.totalorder %s42, 0
      %s45 = sadd.s32 %s44, 1
      %s46 = scalar_select %p43, %s44, %s45
      %p49 = pneg %p43
      %p50 = scmp.eq.s32.totalorder %s13, 1
      %p51 = por %p49, %p50
      %p52 = scmp.ne.s32.totalorder %s44, %s47
      %p53 = scmp.eq.s32.totalorder %s13, 0
      %p54 = por %p52, %p53
      %p55 = scmp.ne.s32.totalorder %s44, %s47
      %p56 = scmp.eq.s32.totalorder %s18, 1
      %p57 = por %p55, %p56
      %p58 = scmp.ne.s32.totalorder %s47, %s48
      %p59 = scmp.eq.s32.totalorder %s18, 0
      %p60 = por %p58, %p59
      %p61 = scmp.ne.s32.totalorder %s47, %s48
      %p62 = scmp.eq.s32.totalorder %s19, 1
      %p63 = por %p61, %p62
      %p65 = scmp.ne.s32.totalorder %s48, %s64
      %p66 = scmp.eq.s32.totalorder %s19, 0
      %p67 = por %p65, %p66
      %s68 = ssub.s32 %s20, %s39
      %s69 = ssub.s32 %s22, %s31
      %s70 = sor.u32 %s68, %s69
      %p71 = scmp.eq.s32.totalorder %s70, 0
      %s73 = sadd.s32 %s72, 1
      %s74 = scalar_select %p71, %s72, %s73
      %p77 = pneg %p71
      %p78 = scmp.eq.s32.totalorder %s13, 1
      %p79 = por %p77, %p78
      %p80 = scmp.ne.s32.totalorder %s72, %s75
      %p81 = scmp.eq.s32.totalorder %s13, 0
      %p82 = por %p80, %p81
      %p83 = scmp.ne.s32.totalorder %s72, %s75
      %p84 = scmp.eq.s32.totalorder %s18, 1
      %p85 = por %p83, %p84
      %p86 = scmp.ne.s32.totalorder %s75, %s76
      %p87 = scmp.eq.s32.totalorder %s18, 0
      %p88 = por %p86, %p87
      %p89 = scmp.ne.s32.totalorder %s75, %s76
      %p90 = scmp.eq.s32.totalorder %s19, 1
      %p91 = por %p89, %p90
      %p93 = scmp.ne.s32.totalorder %s76, %s92
      %p94 = scmp.eq.s32.totalorder %s19, 0
      %p95 = por %p93, %p94
      %s96 = ssub.s32 %s20, %s39
      %s97 = ssub.s32 %s21, %s35
      %s98 = sor.u32 %s96, %s97
      %s99 = ssub.s32 %s22, %s31
      %s100 = sor.u32 %s98, %s99
      %p101 = scmp.eq.s32.totalorder %s100, 0
      %s103 = sadd.s32 %s102, 1
      %s104 = scalar_select %p101, %s102, %s103
      %p107 = pneg %p101
      %p108 = scmp.eq.s32.totalorder %s13, 1
      %p109 = por %p107, %p108
      %p110 = scmp.ne.s32.totalorder %s102, %s105
      %p111 = scmp.eq.s32.totalorder %s13, 0
      %p112 = por %p110, %p111
      %p113 = scmp.ne.s32.totalorder %s102, %s105
      %p114 = scmp.eq.s32.totalorder %s18, 1
      %p115 = por %p113, %p114
      %p116 = scmp.ne.s32.totalorder %s105, %s106
      %p117 = scmp.eq.s32.totalorder %s18, 0
      %p118 = por %p116, %p117
      %p119 = scmp.ne.s32.totalorder %s105, %s106
      %p120 = scmp.eq.s32.totalorder %s19, 1
      %p121 = por %p119, %p120
      %p123 = scmp.ne.s32.totalorder %s106, %s122
      %p124 = scmp.eq.s32.totalorder %s19, 0
      %p125 = por %p123, %p124
      %s127 = sadd.s32 %s126, 1
      %p130 = scmp.eq.s32.totalorder %s13, 1
      %p131 = scmp.ne.s32.totalorder %s126, %s128
      %p132 = scmp.eq.s32.totalorder %s13, 0
      %p133 = por %p131, %p132
      %p134 = scmp.ne.s32.totalorder %s126, %s128
      %p135 = scmp.eq.s32.totalorder %s18, 1
      %p136 = por %p134, %p135
      %p137 = scmp.ne.s32.totalorder %s128, %s129
      %p138 = scmp.eq.s32.totalorder %s18, 0
      %p139 = por %p137, %p138
      %p140 = scmp.ne.s32.totalorder %s128, %s129
      %p141 = scmp.eq.s32.totalorder %s19, 1
      %p142 = por %p140, %p141
      %p144 = scmp.ne.s32.totalorder %s129, %s143
      %p145 = scmp.eq.s32.totalorder %s19, 0
      %p146 = por %p144, %p145
      %s147 = ssub.s32 %s20, %s39
      %s148 = ssub.s32 %s21, %s35
      %s149 = sor.u32 %s147, %s148
      %s150 = ssub.s32 %s22, %s31
      %s151 = sor.u32 %s149, %s150
      %p152 = scmp.eq.s32.totalorder %s151, 0
      %s154 = sadd.s32 %s153, 1
      %s155 = scalar_select %p152, %s153, %s154
      %p158 = pneg %p152
      %p159 = scmp.eq.s32.totalorder %s13, 1
      %p160 = por %p158, %p159
      %p161 = scmp.ne.s32.totalorder %s153, %s156
      %p162 = scmp.eq.s32.totalorder %s13, 0
      %p163 = por %p161, %p162
      %p164 = scmp.ne.s32.totalorder %s153, %s156
      %p165 = scmp.eq.s32.totalorder %s18, 1
      %p166 = por %p164, %p165
      %p167 = scmp.ne.s32.totalorder %s156, %s157
      %p168 = scmp.eq.s32.totalorder %s18, 0
      %p169 = por %p167, %p168
      %p170 = scmp.ne.s32.totalorder %s156, %s157
      %p171 = scmp.eq.s32.totalorder %s19, 1
      %p172 = por %p170, %p171
      %p174 = scmp.ne.s32.totalorder %s157, %s173
      %p175 = scmp.eq.s32.totalorder %s19, 0
      %p176 = por %p174, %p175
      %p177 = scmp.le.s32.totalorder 1, %s13
      %p178 = scmp.lt.s32.totalorder %s13, 3
      %p179 = pnand %p177, %p178
      %p180 = pneg %p179
      // Predicated region
      $region9: #{_message_linear_impl.1} parent=5 // pred_check
        _
      $region10: #{_message_linear_impl.1} parent=5 // pred_check_branch
        %182 = sbr.rel (%p179) target = $region12
      $region11: #{_message_linear_impl.1} parent=5 // pred_region
        %s183 = ssub.s32 %s13, 1
        // Predicated region
        $region13: #{_message_linear_impl.1} parent=11 // pred_check
          %p184 = pneg %p139
        $region14: #{_message_linear_impl.1} parent=11 // pred_check_branch
          %186 = sbr.rel (%p184) target = $region16
        $region15: #{_message_linear_impl.1} parent=11 // pred_region
          _
        $region16: #{_message_linear_impl.1} parent=11 // pred_fallthru
          _
      $region12: #{_message_linear_impl.1} parent=5 // pred_fallthru
        _
      %p187 = scmp.lt.s32.totalorder %s13, 2
      // Predicated region
      $region17: #{_message_linear_impl.1} parent=5 // pred_check
        %p188 = pneg %p187
      $region18: #{_message_linear_impl.1} parent=5 // pred_check_branch
        %190 = sbr.rel (%p188) target = $region20
      $region19: #{_message_linear_impl.1} parent=5 // pred_region
        // Predicated region
        $region21: #{_message_linear_impl.1} parent=19 // pred_check
          %p191 = pneg %p54
        $region22: #{_message_linear_impl.1} parent=19 // pred_check_branch
          %193 = sbr.rel (%p191) target = $region24
        $region23: #{_message_linear_impl.1} parent=19 // pred_region
          %p194 = scmp.lt.s32.totalorder %s20, 1
          %s195 = scalar_select %p194, %s20, 1
          %p196 = scmp.lt.s32.totalorder %s21, 0
          %s197 = scalar_select %p196, %s21, 0
          %s198 = smul.addr %s197, 2
          %s199 = smul.addr %s195, 2
          %s200 = sadd.s32 %s198, %s199
          %s201 = smul.addr %s200, 8
          %s202 = scalar_lea.vmem %s0, %s201
        $region24: #{_message_linear_impl.1} parent=19 // pred_fallthru
          _
        // Predicated region
        $region25: #{_message_linear_impl.1} parent=19 // pred_check
          %p203 = pneg %p82
        $region26: #{_message_linear_impl.1} parent=19 // pred_check_branch
          %205 = sbr.rel (%p203) target = $region28
        $region27: #{_message_linear_impl.1} parent=19 // pred_region
          %p206 = scmp.lt.s32.totalorder %s20, 1
          %s207 = scalar_select %p206, %s20, 1
          %p208 = scmp.lt.s32.totalorder %s22, 0
          %s209 = scalar_select %p208, %s22, 0
          %s210 = smul.addr %s209, 2
          %s211 = smul.addr %s207, 2
          %s212 = sadd.s32 %s210, %s211
          %s213 = smul.addr %s212, 8
          %s214 = scalar_lea.vmem %s1, %s213
        $region28: #{_message_linear_impl.1} parent=19 // pred_fallthru
          _
        // Predicated region
        $region29: #{_message_linear_impl.1} parent=19 // pred_check
          %p215 = pneg %p112
        $region30: #{_message_linear_impl.1} parent=19 // pred_check_branch
          %217 = sbr.rel (%p215) target = $region32
        $region31: #{_message_linear_impl.1} parent=19 // pred_region
          %s218 = smul.u32 8, %s21
          %p219 = scmp.lt.s32.totalorder %s20, 1
          %s220 = scalar_select %p219, %s20, 1
          %p221 = scmp.lt.s32.totalorder %s218, 7
          %s222 = scalar_select %p221, %s218, 7
          %p223 = scmp.lt.s32.totalorder %s22, 0
          %s224 = scalar_select %p223, %s22, 0
          %s225 = sadd.s32 %s224, %s222
          %s226 = smul.addr %s220, 8
          %s227 = sadd.s32 %s225, %s226
          %s228 = smul.addr %s227, 4
          %s229 = scalar_lea.vmem %s2, %s228
          %s230 = smul.u32 8, %s21
        $region32: #{_message_linear_impl.1} parent=19 // pred_fallthru
          _
      $region20: #{_message_linear_impl.1} parent=5 // pred_fallthru
        _
      %p231 = scmp.le.s32.totalorder 1, %s13
      %p232 = scmp.lt.s32.totalorder %s13, 3
      %p233 = pnand %p231, %p232
      %p234 = pneg %p233
      // Predicated region
      $region33: #{_message_linear_impl.1} parent=5 // pred_check
        _
      $region34: #{_message_linear_impl.1} parent=5 // pred_check_branch
        %236 = sbr.rel (%p233) target = $region36
      $region35: #{_message_linear_impl.1} parent=5 // pred_region
        %s237 = ssub.s32 %s13, 1
        %p238 = scmp.lt.s32.totalorder %s23, 1
        %s239 = scalar_select %p238, %s23, 1
        %p240 = scmp.lt.s32.totalorder %s24, 0
        %s241 = scalar_select %p240, %s24, 0
        %s242 = smul.addr %s241, 2
        %s243 = smul.addr %s239, 2
        %s244 = sadd.s32 %s242, %s243
        %s245 = smul.addr %s244, 8
        %s246 = scalar_lea.vmem %s0, %s245
        %p247 = pneg %p60
        %p248 = pneg %p57
        %p249 = scmp.lt.s32.totalorder %s23, 1
        %s250 = scalar_select %p249, %s23, 1
        %p251 = scmp.lt.s32.totalorder %s25, 0
        %s252 = scalar_select %p251, %s25, 0
        %s253 = smul.addr %s252, 2
        %s254 = smul.addr %s250, 2
        %s255 = sadd.s32 %s253, %s254
        %s256 = smul.addr %s255, 8
        %s257 = scalar_lea.vmem %s1, %s256
        %p258 = pneg %p88
        %p259 = pneg %p85
        %s260 = smul.u32 8, %s24
        %p261 = scmp.lt.s32.totalorder %s23, 1
        %s262 = scalar_select %p261, %s23, 1
        %p263 = scmp.lt.s32.totalorder %s260, 7
        %s264 = scalar_select %p263, %s260, 7
        %p265 = scmp.lt.s32.totalorder %s25, 0
        %s266 = scalar_select %p265, %s25, 0
        %s267 = sadd.s32 %s266, %s264
        %s268 = smul.addr %s262, 8
        %s269 = sadd.s32 %s267, %s268
        %s270 = smul.addr %s269, 4
        %s271 = scalar_lea.vmem %s2, %s270
        %p272 = pneg %p118
        %p273 = pneg %p115
        %p274 = pneg %p139
        %p275 = pneg %p136
        %p276 = pneg %p169
        %p277 = pneg %p166
        %s278 = sand.u32 %s156, 1
        %s279 = scalar_lea.sflag [#allocation3], %s278
        %s280 = sand.u32 %s156, 1
        %s281 = smul.addr %s280, 64
        %s282 = scalar_lea.vmem [#allocation2], %s281
        %p283 = scmp.lt.s32.totalorder %s23, 1
        %s284 = scalar_select %p283, %s23, 1
        %p285 = scmp.lt.s32.totalorder %s24, 0
        %s286 = scalar_select %p285, %s24, 0
        %s287 = smul.addr %s286, 2
        %s288 = smul.addr %s284, 2
        %s289 = sadd.s32 %s287, %s288
        %s290 = smul.addr %s289, 8
        %s291 = scalar_lea.vmem %s0, %s290
        %p292 = scmp.lt.s32.totalorder %s23, 1
        %s293 = scalar_select %p292, %s23, 1
        %p294 = scmp.lt.s32.totalorder %s25, 0
        %s295 = scalar_select %p294, %s25, 0
        %s296 = smul.addr %s295, 2
        %s297 = smul.addr %s293, 2
        %s298 = sadd.s32 %s296, %s297
        %s299 = smul.addr %s298, 8
        %s300 = scalar_lea.vmem %s1, %s299
        %s301 = smul.u32 8, %s24
        %p302 = scmp.lt.s32.totalorder %s23, 1
        %s303 = scalar_select %p302, %s23, 1
        %p304 = scmp.lt.s32.totalorder %s301, 7
        %s305 = scalar_select %p304, %s301, 7
        %p306 = scmp.lt.s32.totalorder %s25, 0
        %s307 = scalar_select %p306, %s25, 0
        %s308 = sadd.s32 %s307, %s305
        %s309 = smul.addr %s303, 8
        %s310 = sadd.s32 %s308, %s309
        %s311 = smul.addr %s310, 4
        %s312 = scalar_lea.vmem %s2, %s311
        %s313 = smul.u32 8, %s24
        %s314 = smul.u32 8, %s24
        %v316 = vld [vmem:[%s312] sm:$0xf]
        %v317 = vld [vmem:[%s312 + $0x4] sm:$0xf]
        %v318 = vld [vmem:[%s312 + $0x8] sm:$0xf]
        %v319 = vld [vmem:[%s312 + $0xc] sm:$0xf]
        %v320 = vld [vmem:[%s312 + $0x10] sm:$0xf]
        %v321 = vld [vmem:[%s312 + $0x14] sm:$0xf]
        %v322 = vld [vmem:[%s312 + $0x18] sm:$0xf]
        %v323 = vld [vmem:[%s312 + $0x1c] sm:$0xf]
        %v324 = vld [vmem:[%s3] sm:$0xff]
        %v325 = vld [vmem:[%s3 + $0x8] sm:$0xff]
        %v326 = vld [vmem:[%s3 + $0x10] sm:$0xff]
        %v327 = vld [vmem:[%s3 + $0x18] sm:$0xff]
        %v336 = vunpack.c.l.b16 %v316
        %v337 = vunpack.c.l.b16 %v317
        %v338 = vunpack.c.l.b16 %v318
        %v339 = vunpack.c.l.b16 %v319
        %v340 = vunpack.c.l.b16 %v320
        %v341 = vunpack.c.l.b16 %v321
        %v342 = vunpack.c.l.b16 %v322
        %v343 = vunpack.c.l.b16 %v323
        %v344 = vpack.c.b16 %v337, %v336
        %v345 = vpack.c.b16 %v339, %v338
        %v346 = vpack.c.b16 %v341, %v340
        %v347 = vpack.c.b16 %v343, %v342
        %v352 = vunpack.c.l.b16 %v324
        %v353 = vunpack.c.h.b16 %v324
        %v354 = vunpack.c.l.b16 %v325
        %v355 = vunpack.c.h.b16 %v325
        %v356 = vunpack.c.l.b16 %v326
        %v357 = vunpack.c.h.b16 %v326
        %v358 = vunpack.c.l.b16 %v327
        %v359 = vunpack.c.h.b16 %v327
        %v360 = vpack.c.b16 %v354, %v352
        %v361 = vpack.c.b16 %v355, %v353
        %v362 = vpack.c.b16 %v358, %v356
        %v363 = vpack.c.b16 %v359, %v357
        %vm368 = vcmask 261120
        %v370 = vsel %vm368, %v344, 0
        %v373 = vsel %vm368, %v345, 0
        %v376 = vsel %vm368, %v346, 0
        %v379 = vsel %vm368, %v347, 0
        %381 = vmatpush.bf16.msra.mxu0 0
        %382 = vmatpush.bf16.msra.mxu0 0
        %383 = vmatpush.bf16.msra.mxu0 0
        %384 = vmatpush.bf16.msra.mxu0 0
        %385 = vmatpush.bf16.msra.mxu0 0
        %386 = vmatpush.bf16.msra.mxu0 0
        %387 = vmatpush.bf16.msra.mxu0 %v362
        %388 = vmatpush.bf16.msra.mxu0 %v360
        %389 = vmatmul.bf16.gmra.mxu0 %v370
        %v390 = vpop.f32.mrf.mxu0
        %v391 = vadd.f32 0.0, %v390
        %v392 = vpop.f32.mrf.mxu0
        %v393 = vadd.f32 0.0, %v392
        %394 = vmatmul.bf16.gmra.mxu0 %v373
        %v395 = vpop.f32.mrf.mxu0
        %v396 = vadd.f32 0.0, %v395
        %v397 = vpop.f32.mrf.mxu0
        %v398 = vadd.f32 0.0, %v397
        %399 = vmatmul.bf16.gmra.mxu0 %v376
        %v400 = vpop.f32.mrf.mxu0
        %v401 = vadd.f32 0.0, %v400
        %v402 = vpop.f32.mrf.mxu0
        %v403 = vadd.f32 0.0, %v402
        %404 = vmatmul.bf16.gmra.mxu0 %v379
        %v405 = vpop.f32.mrf.mxu0
        %v406 = vadd.f32 0.0, %v405
        %v407 = vpop.f32.mrf.mxu0
        %v408 = vadd.f32 0.0, %v407
        %409 = vdwg.mxu0
        %410 = vmatpush.bf16.msra.mxu0 0
        %411 = vmatpush.bf16.msra.mxu0 0
        %412 = vmatpush.bf16.msra.mxu0 0
        %413 = vmatpush.bf16.msra.mxu0 0
        %414 = vmatpush.bf16.msra.mxu0 0
        %415 = vmatpush.bf16.msra.mxu0 0
        %416 = vmatpush.bf16.msra.mxu0 %v363
        %417 = vmatpush.bf16.msra.mxu0 %v361
        %418 = vmatmul.bf16.gmra.mxu0 %v370
        %v419 = vpop.f32.mrf.mxu0
        %v420 = vadd.f32 0.0, %v419
        %v421 = vpop.f32.mrf.mxu0
        %v422 = vadd.f32 0.0, %v421
        %423 = vmatmul.bf16.gmra.mxu0 %v373
        %v424 = vpop.f32.mrf.mxu0
        %v425 = vadd.f32 0.0, %v424
        %v426 = vpop.f32.mrf.mxu0
        %v427 = vadd.f32 0.0, %v426
        %428 = vmatmul.bf16.gmra.mxu0 %v376
        %v429 = vpop.f32.mrf.mxu0
        %v430 = vadd.f32 0.0, %v429
        %v431 = vpop.f32.mrf.mxu0
        %v432 = vadd.f32 0.0, %v431
        %433 = vmatmul.bf16.gmra.mxu0 %v379
        %v434 = vpop.f32.mrf.mxu0
        %v435 = vadd.f32 0.0, %v434
        %v436 = vpop.f32.mrf.mxu0
        %v437 = vadd.f32 0.0, %v436
        %438 = vdwg.mxu0
        %v439 = vld [vmem:[%s291] sm:$0xff]
        %v440 = vld [vmem:[%s291 + $0x8] sm:$0xff]
        %v443 = vrot.slane %v440, 7
        %vm444 = vcmask 1040384
        %v445 = vsel %vm444, %v439, %v443
        %vm446 = vcmask 1041409
        %v447 = vsel %vm446, %v439, %v443
        %v448 = vrot.slane %v447, 1
        %vm449 = vcmask 1042434
        %v450 = vsel %vm449, %v439, %v443
        %v451 = vrot.slane %v450, 2
        %vm452 = vcmask 1043459
        %v453 = vsel %vm452, %v439, %v443
        %v454 = vrot.slane %v453, 3
        %vm455 = vcmask 1044484
        %v456 = vsel %vm455, %v439, %v443
        %v457 = vrot.slane %v456, 4
        %vm458 = vcmask 1045509
        %v459 = vsel %vm458, %v439, %v443
        %v460 = vrot.slane %v459, 5
        %vm461 = vcmask 1046534
        %v462 = vsel %vm461, %v439, %v443
        %v463 = vrot.slane %v462, 6
        %vm464 = vcmask 1046528
        %v465 = vsel %vm464, %v443, %v439
        %v466 = vrot.slane %v465, 7
        %v467 = vperm.slane %v445, 0
        %v468 = vperm.slane %v445, 1
        %v469 = vperm.slane %v448, 0
        %v470 = vperm.slane %v448, 1
        %v471 = vperm.slane %v451, 0
        %v472 = vperm.slane %v451, 1
        %v473 = vperm.slane %v454, 0
        %v474 = vperm.slane %v454, 1
        %v475 = vperm.slane %v457, 0
        %v476 = vperm.slane %v457, 1
        %v477 = vperm.slane %v460, 0
        %v478 = vperm.slane %v460, 1
        %v479 = vperm.slane %v463, 0
        %v480 = vperm.slane %v463, 1
        %v481 = vperm.slane %v466, 0
        %v482 = vperm.slane %v466, 1
        %v499 = vadd.f32 %v391, %v467
        %v500 = vadd.f32 %v420, %v468
        %v501 = vadd.f32 %v393, %v469
        %v502 = vadd.f32 %v422, %v470
        %v503 = vadd.f32 %v396, %v471
        %v504 = vadd.f32 %v425, %v472
        %v505 = vadd.f32 %v398, %v473
        %v506 = vadd.f32 %v427, %v474
        %v507 = vadd.f32 %v401, %v475
        %v508 = vadd.f32 %v430, %v476
        %v509 = vadd.f32 %v403, %v477
        %v510 = vadd.f32 %v432, %v478
        %v511 = vadd.f32 %v406, %v479
        %v512 = vadd.f32 %v435, %v480
        %v513 = vadd.f32 %v408, %v481
        %v514 = vadd.f32 %v437, %v482
        %v515 = vld [vmem:[%s300] sm:$0xff]
        %v516 = vld [vmem:[%s300 + $0x8] sm:$0xff]
        %v517 = vadd.f32 %v499, %v515
        %v518 = vadd.f32 %v500, %v516
        %v519 = vadd.f32 %v501, %v515
        %v520 = vadd.f32 %v502, %v516
        %v521 = vadd.f32 %v503, %v515
        %v522 = vadd.f32 %v504, %v516
        %v523 = vadd.f32 %v505, %v515
        %v524 = vadd.f32 %v506, %v516
        %v525 = vadd.f32 %v507, %v515
        %v526 = vadd.f32 %v508, %v516
        %v527 = vadd.f32 %v509, %v515
        %v528 = vadd.f32 %v510, %v516
        %v529 = vadd.f32 %v511, %v515
        %v530 = vadd.f32 %v512, %v516
        %v531 = vadd.f32 %v513, %v515
        %v532 = vadd.f32 %v514, %v516
        %v533 = vpack.c.bf16 %v518, %v517
        %v534 = vpack.c.bf16 %v520, %v519
        %v535 = vpack.c.bf16 %v522, %v521
        %v536 = vpack.c.bf16 %v524, %v523
        %v537 = vpack.c.bf16 %v526, %v525
        %v538 = vpack.c.bf16 %v528, %v527
        %v539 = vpack.c.bf16 %v530, %v529
        %v540 = vpack.c.bf16 %v532, %v531
        %vm541 = vcmask 1043456
        %vm542 = vcmask 523268
        %vm543 = vmor %vm542, %vm541
        %544 = vst.msk [vmem:[%s282] sm:$0xff] %vm543, %v533
        %545 = vst.msk [vmem:[%s282 + $0x8] sm:$0xff] %vm543, %v534
        %546 = vst.msk [vmem:[%s282 + $0x10] sm:$0xff] %vm543, %v535
        %547 = vst.msk [vmem:[%s282 + $0x18] sm:$0xff] %vm543, %v536
        %548 = vst.msk [vmem:[%s282 + $0x20] sm:$0xff] %vm543, %v537
        %549 = vst.msk [vmem:[%s282 + $0x28] sm:$0xff] %vm543, %v538
        %550 = vst.msk [vmem:[%s282 + $0x30] sm:$0xff] %vm543, %v539
        %551 = vst.msk [vmem:[%s282 + $0x38] sm:$0xff] %vm543, %v540
        %s552 = sand.u32 %s156, 1
        %s553 = scalar_lea.sflag [#allocation3], %s552
        %s554 = sand.u32 %s156, 1
        %s555 = smul.addr %s554, 64
        %s556 = scalar_lea.vmem [#allocation2], %s555
        // Predicated region
        $region37: #{_message_linear_impl.1} parent=35 // pred_check
          %p557 = pneg %p166
        $region38: #{_message_linear_impl.1} parent=35 // pred_check_branch
          %559 = sbr.rel (%p557) target = $region40
        $region39: #{_message_linear_impl.1} parent=35 // pred_region
          %s560 = smul.u32 8, %s24
          %562 = vsyncadd %s553, 0
          %s563 = smul.addr %s25, 2
          %s564 = smul.addr %s560, 2
          %s565 = sadd.s32 %s563, %s564
          %s566 = smul.addr %s23, 16
          %s567 = sadd.s32 %s565, %s566
          %s568 = smul.addr %s567, 4
          %s569 = scalar_lea.hbm %s4, %s568
          %s570 = sshll.u32 %s556, 4
          %s571 = int_to_ptr.vmem [resolvable:$true] %s570
          %s572 = sshll.u32 %s569, 4
          %s573 = int_to_ptr.hbm [resolvable:$true] %s572
          %578 = dma.vmem_to_hbm [thread:$0]  %s571, 1024, %s573, %s553, 128, 128, 8
        $region40: #{_message_linear_impl.1} parent=35 // pred_fallthru
          _
      $region36: #{_message_linear_impl.1} parent=5 // pred_fallthru
        _
      %p579 = scmp.le.s32.totalorder 2, %s13
      // Predicated region
      $region41: #{_message_linear_impl.1} parent=5 // pred_check
        %p580 = pneg %p579
      $region42: #{_message_linear_impl.1} parent=5 // pred_check_branch
        %582 = sbr.rel (%p580) target = $region44
      $region43: #{_message_linear_impl.1} parent=5 // pred_region
        %s583 = ssub.s32 %s13, 2
        // Predicated region
        $region45: #{_message_linear_impl.1} parent=43 // pred_check
          %p584 = pneg %p172
        $region46: #{_message_linear_impl.1} parent=43 // pred_check_branch
          %586 = sbr.rel (%p584) target = $region48
        $region47: #{_message_linear_impl.1} parent=43 // pred_region
          %s587 = sand.u32 %s157, 1
          %s588 = scalar_lea.sflag [#allocation3], %s587
          %s589 = sand.u32 %s157, 1
          %s590 = smul.addr %s589, 64
          %s591 = scalar_lea.vmem [#allocation2], %s590
          %593 = dma.done %s588, 1024
        $region48: #{_message_linear_impl.1} parent=43 // pred_fallthru
          _
      $region44: #{_message_linear_impl.1} parent=5 // pred_fallthru
        _
    $region6: #{_message_linear_impl.1} parent=1 // loop_footer
      %s17 = sadd.s32 1, %s13
    $region7: #{_message_linear_impl.1} parent=1 // loop_footer_branch
      %12 = sbr.rel target = $region3
    $region8: #{_message_linear_impl.1} parent=1 // loop_exit
      _
    %594 = vsyncpa [#allocation3], 1
    %s595 = scalar_lea.sflag [#allocation3], 1
    %596 = vsyncpa %s595, 1

</llo_original>
